<compile_context>
chip_gen: v5e
topology: v5e:2x2
jax: 0.10.0
libtpu: 0.0.40
codegen_flags: <defaults>
</compile_context>

<pallas_src>
import jax
import jax.numpy as jnp
from jax.experimental import pallas as pl
from jax.experimental.pallas import tpu as pltpu


def _make_gcn_kernel(b_blk, has_bias):
    """Build a kernel processing `b_blk` batch elements per grid step."""

    def kernel(*refs):
        if has_bias:
            text_ref, adj_ref, w_ref, b_ref, out_ref = refs
        else:
            text_ref, adj_ref, w_ref, out_ref = refs
            b_ref = None

        w = w_ref[...]  # (F_in, F_out_pad), native dtype

        # Unrolled static loop over the batch elements of this block.  Each
        # iteration is a pair of plain 2-D MXU matmuls (the adjacency differs
        # per batch element, so the second matmul cannot be merged across the
        # batch anyway); unrolling amortizes the per-grid-step overhead.
        for i in range(b_blk):
            text_i = text_ref[i]          # (N, F_in)
            adj_i = adj_ref[i]            # (N, N)

            # hidden = text @ W, f32 accumulation on the MXU.
            hidden = jnp.dot(text_i, w, preferred_element_type=jnp.float32)

            # denom = row-sum(adj) + 1, accumulated in f32.
            denom = jnp.sum(adj_i.astype(jnp.float32), axis=-1,
                            keepdims=True) + 1.0                 # (N, 1)

            # (adj @ hidden) * (1/denom): reciprocal on the small (N, 1)
            # tensor, broadcast-multiply instead of a full-tile divide.
            agg = jnp.dot(adj_i, hidden,
                          preferred_element_type=jnp.float32)    # (N, F_out_pad)
            out = agg * pl.reciprocal(denom)

            if has_bias:
                out = out + b_ref[...].astype(jnp.float32)       # (1, F_out_pad)

            out_ref[i] = out.astype(out_ref.dtype)

    return kernel


def _choose_batch_block(B, per_batch_bytes, fixed_bytes,
                        vmem_budget_bytes=16 * 1024 * 1024, max_unroll=8):
    """Largest batch block that (a) divides B, (b) fits a conservative VMEM
    budget (double-buffered), (c) keeps the grid >= 2 for megacore, and
    (d) keeps the in-kernel unroll small."""
    if B <= 1:
        return 1
    avail = max(vmem_budget_bytes - fixed_bytes, per_batch_bytes)
    blk = int(avail // max(per_batch_bytes, 1))
    blk = max(1, min(blk, max_unroll, max(1, B // 2)))
    while blk > 1 and B % blk != 0:
        blk -= 1
    return blk


def graph_convolution(text, adj, weight, bias=None, *, vmem_limit_bytes=None):
    """Pallas GraphConvolution forward.

    text:   (B, N, F_in)   any float dtype (bf16 recommended for bandwidth)
    adj:    (B, N, N)
    weight: (F_in, F_out)
    bias:   (F_out,) or None
    returns (B, N, F_out) float32 (the module computes in float32)
    """
    B, N, F_in = text.shape
    assert adj.shape == (B, N, N)
    F_in_w, F_out = weight.shape
    assert F_in_w == F_in

    out_dtype = jnp.float32

    # Lane-dense output: pad F_out up to 128 when narrower than a vreg row so
    # the output stores are unmasked; padding is sliced off afterwards.
    F_out_pad = 128 if F_out < 128 else F_out
    if F_out_pad != F_out:
        weight_p = jnp.pad(weight, ((0, 0), (0, F_out_pad - F_out)))
    else:
        weight_p = weight

    has_bias = bias is not None
    if has_bias:
        bias_p = bias.reshape(1, F_out)
        if F_out_pad != F_out:
            bias_p = jnp.pad(bias_p, ((0, 0), (0, F_out_pad - F_out)))

    isz = lambda x: jnp.dtype(x.dtype).itemsize
    per_batch_bytes = 2 * (N * F_in * isz(text)
                           + N * N * isz(adj)
                           + N * F_out_pad * jnp.dtype(out_dtype).itemsize)
    fixed_bytes = 2 * F_in * F_out_pad * isz(weight_p)
    if has_bias:
        fixed_bytes += 2 * F_out_pad * isz(bias_p)
    b_blk = _choose_batch_block(B, per_batch_bytes, fixed_bytes)
    grid = (B // b_blk,)

    in_specs = [
        pl.BlockSpec((b_blk, N, F_in), lambda b: (b, 0, 0)),
        pl.BlockSpec((b_blk, N, N), lambda b: (b, 0, 0)),
        pl.BlockSpec((F_in, F_out_pad), lambda b: (0, 0)),
    ]
    inputs = [text, adj, weight_p]
    if has_bias:
        in_specs.append(pl.BlockSpec((1, F_out_pad), lambda b: (0, 0)))
        inputs.append(bias_p)

    out_specs = pl.BlockSpec((b_blk, N, F_out_pad), lambda b: (b, 0, 0))
    out_shape = jax.ShapeDtypeStruct((B, N, F_out_pad), out_dtype)

    flops = (2 * B * N * F_in * F_out_pad      # text @ W
             + 2 * B * N * N * F_out_pad       # adj @ hidden
             + B * N * N)                      # row-sum
    bytes_accessed = (text.size * isz(text)
                      + adj.size * isz(adj)
                      + weight_p.size * isz(weight_p)
                      + B * N * F_out_pad * jnp.dtype(out_dtype).itemsize)
    if has_bias:
        bytes_accessed += bias_p.size * isz(bias_p)
    cost = pl.CostEstimate(flops=flops, transcendentals=B * N,
                           bytes_accessed=bytes_accessed)

    out = pl.pallas_call(
        _make_gcn_kernel(b_blk, has_bias),
        out_shape=out_shape,
        grid_spec=pltpu.PrefetchScalarGridSpec(
            num_scalar_prefetch=0,
            grid=grid,
            in_specs=in_specs,
            out_specs=out_specs,
        ),
        compiler_params=pltpu.CompilerParams(
            dimension_semantics=("parallel",),
            vmem_limit_bytes=vmem_limit_bytes,
        ),
        cost_estimate=cost,
    )(*inputs)

    if F_out_pad != F_out:
        out = out[:, :, :F_out]
    return out


if __name__ == "__main__":
    # Small deterministic example consistent with the module:
    # batch=4, seq/nodes=8, in_features=32, out_features=16.
    B, N, F_IN, F_OUT = 4, 8, 32, 16

    key = jax.random.PRNGKey(0)
    k_text, k_adj, k_w, k_b = jax.random.split(key, 4)

    text = jax.random.normal(k_text, (B, N, F_IN), dtype=jnp.float32)
    adj = jax.random.uniform(k_adj, (B, N, N), dtype=jnp.float32)
    weight = jax.random.normal(k_w, (F_IN, F_OUT), dtype=jnp.float32) * 0.1
    bias = jax.random.normal(k_b, (F_OUT,), dtype=jnp.float32) * 0.1

    out = jax.block_until_ready(graph_convolution(text, adj, weight, bias))
    out_nobias = jax.block_until_ready(graph_convolution(text, adj, weight, None))

    # Pure-JAX reference.
    hidden_ref = jnp.matmul(text, weight)
    denom_ref = jnp.sum(adj, axis=2, keepdims=True) + 1.0
    ref_nobias = jnp.matmul(adj, hidden_ref) / denom_ref
    ref = ref_nobias + bias

    assert out.shape == (B, N, F_OUT)
    assert out_nobias.shape == (B, N, F_OUT)
    assert jnp.allclose(out, ref, atol=1e-5, rtol=1e-5)
    assert jnp.allclose(out_nobias, ref_nobias, atol=1e-5, rtol=1e-5)

    print("KERNEL_OK")
</pallas_src>

<mosaic_0001>
module attributes {stable_mosaic.version = 11 : i64} {
  func.func @kernel(%arg0: i32, %arg1: memref<2x8x32xf32, #tpu.memory_space<vmem>>, %arg2: memref<2x8x8xf32, #tpu.memory_space<vmem>>, %arg3: memref<32x128xf32, #tpu.memory_space<vmem>>, %arg4: memref<1x128xf32, #tpu.memory_space<vmem>>, %arg5: memref<2x8x128xf32, #tpu.memory_space<vmem>>) attributes {dimension_semantics = [#tpu.dimension_semantics<parallel>], iteration_bounds = array<i64: 2>, scalar_prefetch = 0 : i64, scratch_operands = 0 : i64, tpu.core_type = #tpu.core_type<tc>, window_params = [{transform_indices = @transform_0, window_bounds = array<i64: 2, 8, 32>}, {transform_indices = @transform_1, window_bounds = array<i64: 2, 8, 8>}, {pipeline_mode = #tpu.pipeline_mode<synchronous>, transform_indices = @transform_2, window_bounds = array<i64: 32, 128>}, {pipeline_mode = #tpu.pipeline_mode<synchronous>, transform_indices = @transform_3, window_bounds = array<i64: 1, 128>}, {transform_indices = @transform_4, window_bounds = array<i64: 2, 8, 128>}]} {
    %c0 = arith.constant 0 : index
    %c0_0 = arith.constant 0 : index
    %0 = vector.load %arg3[%c0, %c0_0] : memref<32x128xf32, #tpu.memory_space<vmem>>, vector<32x128xf32>
    %c0_1 = arith.constant 0 : index
    %c0_2 = arith.constant 0 : index
    %c0_3 = arith.constant 0 : index
    %1 = vector.load %arg1[%c0_1, %c0_2, %c0_3] : memref<2x8x32xf32, #tpu.memory_space<vmem>>, vector<1x8x32xf32>
    %2 = vector.shape_cast %1 : vector<1x8x32xf32> to vector<8x32xf32>
    %c0_4 = arith.constant 0 : index
    %c0_5 = arith.constant 0 : index
    %c0_6 = arith.constant 0 : index
    %3 = vector.load %arg2[%c0_4, %c0_5, %c0_6] : memref<2x8x8xf32, #tpu.memory_space<vmem>>, vector<1x8x8xf32>
    %4 = vector.shape_cast %3 : vector<1x8x8xf32> to vector<8x8xf32>
    %cst = arith.constant dense<0.000000e+00> : vector<8x128xf32>
    %5 = tpu.matmul %2, %0, %cst {dimension_numbers = #tpu.dot_dimension_numbers<[1], [0], [0], [1], [0, 0, 1, 1], [], []>} : vector<8x32xf32>, vector<32x128xf32>, vector<8x128xf32> -> vector<8x128xf32>
    %cst_7 = arith.constant dense<0.000000e+00> : vector<8xf32>
    %6 = vector.multi_reduction <add>, %4, %cst_7 [1] : vector<8x8xf32> to vector<8xf32>
    %7 = vector.shape_cast %6 : vector<8xf32> to vector<8x1xf32>
    %cst_8 = arith.constant 1.000000e+00 : f32
    %8 = vector.broadcast %cst_8 : f32 to vector<8x1xf32>
    %9 = arith.addf %7, %8 : vector<8x1xf32>
    %cst_9 = arith.constant dense<0.000000e+00> : vector<8x128xf32>
    %10 = tpu.matmul %4, %5, %cst_9 {dimension_numbers = #tpu.dot_dimension_numbers<[1], [0], [0], [1], [0, 0, 1, 1], [], []>} : vector<8x8xf32>, vector<8x128xf32>, vector<8x128xf32> -> vector<8x128xf32>
    %11 = tpu.reciprocal %9 : vector<8x1xf32> -> vector<8x1xf32>
    %12 = vector.broadcast %11 : vector<8x1xf32> to vector<8x128xf32>
    %13 = arith.mulf %10, %12 : vector<8x128xf32>
    %c0_10 = arith.constant 0 : index
    %c0_11 = arith.constant 0 : index
    %14 = vector.load %arg4[%c0_10, %c0_11] : memref<1x128xf32, #tpu.memory_space<vmem>>, vector<1x128xf32>
    %15 = vector.broadcast %14 : vector<1x128xf32> to vector<8x128xf32>
    %16 = arith.addf %13, %15 : vector<8x128xf32>
    %c0_12 = arith.constant 0 : index
    %c0_13 = arith.constant 0 : index
    %c0_14 = arith.constant 0 : index
    %17 = vector.load %arg5[%c0_12, %c0_13, %c0_14] : memref<2x8x128xf32, #tpu.memory_space<vmem>>, vector<1x8x128xf32>
    %18 = vector.shape_cast %17 : vector<1x8x128xf32> to vector<8x128xf32>
    %19 = vector.shape_cast %16 : vector<8x128xf32> to vector<1x8x128xf32>
    tpu.vector_store %arg5[%c0_12, %c0_13, %c0_14], %19 {strides = array<i32>} : memref<2x8x128xf32, #tpu.memory_space<vmem>>, vector<1x8x128xf32>,
    %c1 = arith.constant 1 : index
    %c0_15 = arith.constant 0 : index
    %c0_16 = arith.constant 0 : index
    %20 = vector.load %arg1[%c1, %c0_15, %c0_16] : memref<2x8x32xf32, #tpu.memory_space<vmem>>, vector<1x8x32xf32>
    %21 = vector.shape_cast %20 : vector<1x8x32xf32> to vector<8x32xf32>
    %c1_17 = arith.constant 1 : index
    %c0_18 = arith.constant 0 : index
    %c0_19 = arith.constant 0 : index
    %22 = vector.load %arg2[%c1_17, %c0_18, %c0_19] : memref<2x8x8xf32, #tpu.memory_space<vmem>>, vector<1x8x8xf32>
    %23 = vector.shape_cast %22 : vector<1x8x8xf32> to vector<8x8xf32>
    %cst_20 = arith.constant dense<0.000000e+00> : vector<8x128xf32>
    %24 = tpu.matmul %21, %0, %cst_20 {dimension_numbers = #tpu.dot_dimension_numbers<[1], [0], [0], [1], [0, 0, 1, 1], [], []>} : vector<8x32xf32>, vector<32x128xf32>, vector<8x128xf32> -> vector<8x128xf32>
    %cst_21 = arith.constant dense<0.000000e+00> : vector<8xf32>
    %25 = vector.multi_reduction <add>, %23, %cst_21 [1] : vector<8x8xf32> to vector<8xf32>
    %26 = vector.shape_cast %25 : vector<8xf32> to vector<8x1xf32>
    %cst_22 = arith.constant 1.000000e+00 : f32
    %27 = vector.broadcast %cst_22 : f32 to vector<8x1xf32>
    %28 = arith.addf %26, %27 : vector<8x1xf32>
    %cst_23 = arith.constant dense<0.000000e+00> : vector<8x128xf32>
    %29 = tpu.matmul %23, %24, %cst_23 {dimension_numbers = #tpu.dot_dimension_numbers<[1], [0], [0], [1], [0, 0, 1, 1], [], []>} : vector<8x8xf32>, vector<8x128xf32>, vector<8x128xf32> -> vector<8x128xf32>
    %30 = tpu.reciprocal %28 : vector<8x1xf32> -> vector<8x1xf32>
    %31 = vector.broadcast %30 : vector<8x1xf32> to vector<8x128xf32>
    %32 = arith.mulf %29, %31 : vector<8x128xf32>
    %c0_24 = arith.constant 0 : index
    %c0_25 = arith.constant 0 : index
    %33 = vector.load %arg4[%c0_24, %c0_25] : memref<1x128xf32, #tpu.memory_space<vmem>>, vector<1x128xf32>
    %34 = vector.broadcast %33 : vector<1x128xf32> to vector<8x128xf32>
    %35 = arith.addf %32, %34 : vector<8x128xf32>
    %c1_26 = arith.constant 1 : index
    %c0_27 = arith.constant 0 : index
    %c0_28 = arith.constant 0 : index
    %36 = vector.load %arg5[%c1_26, %c0_27, %c0_28] : memref<2x8x128xf32, #tpu.memory_space<vmem>>, vector<1x8x128xf32>
    %37 = vector.shape_cast %36 : vector<1x8x128xf32> to vector<8x128xf32>
    %38 = vector.shape_cast %35 : vector<8x128xf32> to vector<1x8x128xf32>
    tpu.vector_store %arg5[%c1_26, %c0_27, %c0_28], %38 {strides = array<i32>} : memref<2x8x128xf32, #tpu.memory_space<vmem>>, vector<1x8x128xf32>,
    return
  }
  func.func @transform_0(%arg0: i32) -> (i32, i32, i32) {
    %c0_i32 = arith.constant 0 : i32
    %c0_i32_0 = arith.constant 0 : i32
    %c0_i32_1 = arith.constant 0 : i32
    return %arg0, %c0_i32, %c0_i32_0 : i32, i32, i32
  }
  func.func @transform_1(%arg0: i32) -> (i32, i32, i32) {
    %c0_i32 = arith.constant 0 : i32
    %c0_i32_0 = arith.constant 0 : i32
    %c0_i32_1 = arith.constant 0 : i32
    return %arg0, %c0_i32, %c0_i32_0 : i32, i32, i32
  }
  func.func @transform_2(%arg0: i32) -> (i32, i32) {
    %c0_i32 = arith.constant 0 : i32
    %c0_i32_0 = arith.constant 0 : i32
    %c0_i32_1 = arith.constant 0 : i32
    return %c0_i32, %c0_i32_0 : i32, i32
  }
  func.func @transform_3(%arg0: i32) -> (i32, i32) {
    %c0_i32 = arith.constant 0 : i32
    %c0_i32_0 = arith.constant 0 : i32
    %c0_i32_1 = arith.constant 0 : i32
    return %c0_i32, %c0_i32_0 : i32, i32
  }
  func.func @transform_4(%arg0: i32) -> (i32, i32, i32) {
    %c0_i32 = arith.constant 0 : i32
    %c0_i32_0 = arith.constant 0 : i32
    %c0_i32_1 = arith.constant 0 : i32
    return %arg0, %c0_i32, %c0_i32_0 : i32, i32, i32
  }
}

</mosaic_0001>

<llo_original>
// kernel: tpu_custom_call.1
$region0: #{tpu_custom_call.1}
  #allocation0 [shape = 'u32[]', space=smem, size = 0x4, offset = 0x4, fixed_abs, tag = 'smem constant byte address 0x4 - core index']
  #allocation1 [shape = 'u32[72,128]{1,0:T(1,128)}', space=vmem, size = 0x9000, scoped, tag = 'internal scratch']
  %s0 = inlined_call_operand.hbm [shape: f32[4,8,32], index: 0, kind: input, shape index: {}]
  %s1 = inlined_call_operand.hbm [shape: f32[4,8,8], index: 1, kind: input, shape index: {}]
  %s2 = inlined_call_operand.hbm [shape: f32[32,128], index: 2, kind: input, shape index: {}]
  %s3 = inlined_call_operand.vmem [shape: f32[1,128], index: 3, kind: input, shape index: {}]
  %s4 = inlined_call_operand.hbm [shape: f32[4,8,128], index: 4, kind: output, shape index: {}]
  %s5 = sld [smem:[#allocation0]]
  $region61: #{tpu_custom_call.1} parent=0
    _
  %s7 = ssub.s32 1, %s5
  %s8 = scalar_select 0, %s7, %s5
  $region1: #{tpu_custom_call.1} parent=0
    #allocation2 [shape = 'u8[16384]{0}', space=vmem, size = 0x4000, scoped, tag = 'input window, operand 0']
    #allocation3 [shape = 's32[2]{0}', space=sflag, size = 0x8, scoped, tag = 'scoped memory for tpu_custom_call.1']
    #allocation4 [shape = 's32[2]{0}', space=sflag, size = 0x8, scoped, tag = 'scoped memory for tpu_custom_call.1']
    #allocation5 [shape = 'u8[16384]{0}', space=vmem, size = 0x4000, scoped, tag = 'input window, operand 1']
    #allocation6 [shape = 's32[2]{0}', space=sflag, size = 0x8, scoped, tag = 'scoped memory for tpu_custom_call.1']
    #allocation7 [shape = 'u8[16384]{0}', space=vmem, size = 0x4000, scoped, tag = 'input window, operand 2, single buffered']
    #allocation8 [shape = 'u8[16384]{0}', space=vmem, size = 0x4000, scoped, tag = 'output window, operand 0']
    %9 = vsyncpa [#allocation3], 0
    %s10 = scalar_lea.sflag [#allocation3], 1
    %11 = vsyncpa %s10, 0
    %12 = vsyncpa [#allocation6], 0
    %s13 = scalar_lea.sflag [#allocation6], 1
    %14 = vsyncpa %s13, 0
    %15 = vsyncpa [#allocation4], 0
    %s16 = scalar_lea.sflag [#allocation4], 1
    %17 = vsyncpa %s16, 0
    loop: start=0, step=1, limit=4
    $region2: #{tpu_custom_call.1} parent=1 // loop_pre_header
      _
    $region3: #{tpu_custom_call.1} parent=1 // loop_header
      %s19 = sphi 0, %s23
      %p20 = scmp.ge.s32.totalorder %s19, 4
      %s29 = sphi 0, %s31
      %s32 = sphi 0, %s29
      %s33 = sphi 0, %s32
      %s49 = sphi 0, %s33
      %s55 = sphi 0, %s57
      %s58 = sphi 0, %s55
      %s59 = sphi 0, %s58
      %s75 = sphi 0, %s59
      %s79 = sphi 0, %s79
      %s81 = sphi 0, %s79
      %s82 = sphi 0, %s81
      %s96 = sphi 0, %s82
      %s100 = sphi 0, %s100
      %s102 = sphi 0, %s100
      %s103 = sphi 0, %s102
      %s117 = sphi 0, %s103
      %s123 = sphi 0, %s125
      %s126 = sphi 0, %s123
      %s127 = sphi 0, %s126
      %s143 = sphi 0, %s127
    $region4: #{tpu_custom_call.1} parent=1 // loop_header_branch
      %22 = sbr.rel (%p20) target = $region8
    $region5: #{tpu_custom_call.1} parent=1 // loop_body
      %s24 = ssub.s32 %s19, 1
      %s25 = ssub.s32 %s19, 2
      %s26 = sadd.s32 %s19, 1
      %s27 = ssub.s32 %s19, %s26
      %p28 = scmp.eq.s32.totalorder %s27, 0
      %s30 = sadd.s32 %s29, 1
      %s31 = scalar_select %p28, %s29, %s30
      %p34 = pneg %p28
      %p35 = scmp.eq.s32.totalorder %s19, 1
      %p36 = por %p34, %p35
      %p37 = scmp.ne.s32.totalorder %s29, %s32
      %p38 = scmp.eq.s32.totalorder %s19, 0
      %p39 = por %p37, %p38
      %p40 = scmp.ne.s32.totalorder %s29, %s32
      %p41 = scmp.eq.s32.totalorder %s24, 1
      %p42 = por %p40, %p41
      %p43 = scmp.ne.s32.totalorder %s32, %s33
      %p44 = scmp.eq.s32.totalorder %s24, 0
      %p45 = por %p43, %p44
      %p46 = scmp.ne.s32.totalorder %s32, %s33
      %p47 = scmp.eq.s32.totalorder %s25, 1
      %p48 = por %p46, %p47
      %p50 = scmp.ne.s32.totalorder %s33, %s49
      %p51 = scmp.eq.s32.totalorder %s25, 0
      %p52 = por %p50, %p51
      %s53 = ssub.s32 %s19, %s26
      %p54 = scmp.eq.s32.totalorder %s53, 0
      %s56 = sadd.s32 %s55, 1
      %s57 = scalar_select %p54, %s55, %s56
      %p60 = pneg %p54
      %p61 = scmp.eq.s32.totalorder %s19, 1
      %p62 = por %p60, %p61
      %p63 = scmp.ne.s32.totalorder %s55, %s58
      %p64 = scmp.eq.s32.totalorder %s19, 0
      %p65 = por %p63, %p64
      %p66 = scmp.ne.s32.totalorder %s55, %s58
      %p67 = scmp.eq.s32.totalorder %s24, 1
      %p68 = por %p66, %p67
      %p69 = scmp.ne.s32.totalorder %s58, %s59
      %p70 = scmp.eq.s32.totalorder %s24, 0
      %p71 = por %p69, %p70
      %p72 = scmp.ne.s32.totalorder %s58, %s59
      %p73 = scmp.eq.s32.totalorder %s25, 1
      %p74 = por %p72, %p73
      %p76 = scmp.ne.s32.totalorder %s59, %s75
      %p77 = scmp.eq.s32.totalorder %s25, 0
      %p78 = por %p76, %p77
      %s80 = sadd.s32 %s79, 1
      %p83 = scmp.eq.s32.totalorder %s19, 1
      %p84 = scmp.ne.s32.totalorder %s79, %s81
      %p85 = scmp.eq.s32.totalorder %s19, 0
      %p86 = por %p84, %p85
      %p87 = scmp.ne.s32.totalorder %s79, %s81
      %p88 = scmp.eq.s32.totalorder %s24, 1
      %p89 = por %p87, %p88
      %p90 = scmp.ne.s32.totalorder %s81, %s82
      %p91 = scmp.eq.s32.totalorder %s24, 0
      %p92 = por %p90, %p91
      %p93 = scmp.ne.s32.totalorder %s81, %s82
      %p94 = scmp.eq.s32.totalorder %s25, 1
      %p95 = por %p93, %p94
      %p97 = scmp.ne.s32.totalorder %s82, %s96
      %p98 = scmp.eq.s32.totalorder %s25, 0
      %p99 = por %p97, %p98
      %s101 = sadd.s32 %s100, 1
      %p104 = scmp.eq.s32.totalorder %s19, 1
      %p105 = scmp.ne.s32.totalorder %s100, %s102
      %p106 = scmp.eq.s32.totalorder %s19, 0
      %p107 = por %p105, %p106
      %p108 = scmp.ne.s32.totalorder %s100, %s102
      %p109 = scmp.eq.s32.totalorder %s24, 1
      %p110 = por %p108, %p109
      %p111 = scmp.ne.s32.totalorder %s102, %s103
      %p112 = scmp.eq.s32.totalorder %s24, 0
      %p113 = por %p111, %p112
      %p114 = scmp.ne.s32.totalorder %s102, %s103
      %p115 = scmp.eq.s32.totalorder %s25, 1
      %p116 = por %p114, %p115
      %p118 = scmp.ne.s32.totalorder %s103, %s117
      %p119 = scmp.eq.s32.totalorder %s25, 0
      %p120 = por %p118, %p119
      %s121 = ssub.s32 %s19, %s26
      %p122 = scmp.eq.s32.totalorder %s121, 0
      %s124 = sadd.s32 %s123, 1
      %s125 = scalar_select %p122, %s123, %s124
      %p128 = pneg %p122
      %p129 = scmp.eq.s32.totalorder %s19, 1
      %p130 = por %p128, %p129
      %p131 = scmp.ne.s32.totalorder %s123, %s126
      %p132 = scmp.eq.s32.totalorder %s19, 0
      %p133 = por %p131, %p132
      %p134 = scmp.ne.s32.totalorder %s123, %s126
      %p135 = scmp.eq.s32.totalorder %s24, 1
      %p136 = por %p134, %p135
      %p137 = scmp.ne.s32.totalorder %s126, %s127
      %p138 = scmp.eq.s32.totalorder %s24, 0
      %p139 = por %p137, %p138
      %p140 = scmp.ne.s32.totalorder %s126, %s127
      %p141 = scmp.eq.s32.totalorder %s25, 1
      %p142 = por %p140, %p141
      %p144 = scmp.ne.s32.totalorder %s127, %s143
      %p145 = scmp.eq.s32.totalorder %s25, 0
      %p146 = por %p144, %p145
      %p147 = scmp.le.s32.totalorder 1, %s19
      %p148 = scmp.lt.s32.totalorder %s19, 3
      %p149 = pnand %p147, %p148
      %p150 = pneg %p149
      // Predicated region
      $region9: #{tpu_custom_call.1} parent=5 // pred_check
        _
      $region10: #{tpu_custom_call.1} parent=5 // pred_check_branch
        %152 = sbr.rel (%p149) target = $region12
      $region11: #{tpu_custom_call.1} parent=5 // pred_region
        %s153 = ssub.s32 %s19, 1
        // Predicated region
        $region13: #{tpu_custom_call.1} parent=11 // pred_check
          %p154 = pneg %p92
        $region14: #{tpu_custom_call.1} parent=11 // pred_check_branch
          %156 = sbr.rel (%p154) target = $region16
        $region15: #{tpu_custom_call.1} parent=11 // pred_region
          %158 = vsyncadd [#allocation6], 0
          %s159 = sshll.u32 %s2, 4
          %s160 = int_to_ptr.hbm [resolvable:$true] %s159
          %s161 = sshll.u32 [#allocation7], 4
          %s162 = int_to_ptr.vmem [resolvable:$true] %s161
          %167 = dma.hbm_to_vmem [thread:$0]  %s160, 512, %s162, [#allocation6], 128, 128, 8
        $region16: #{tpu_custom_call.1} parent=11 // pred_fallthru
          _
        // Predicated region
        $region17: #{tpu_custom_call.1} parent=11 // pred_check
          %p168 = pneg %p113
        $region18: #{tpu_custom_call.1} parent=11 // pred_check_branch
          %170 = sbr.rel (%p168) target = $region20
        $region19: #{tpu_custom_call.1} parent=11 // pred_region
          _
        $region20: #{tpu_custom_call.1} parent=11 // pred_fallthru
          _
      $region12: #{tpu_custom_call.1} parent=5 // pred_fallthru
        _
      %p171 = scmp.lt.s32.totalorder %s19, 2
      // Predicated region
      $region21: #{tpu_custom_call.1} parent=5 // pred_check
        %p172 = pneg %p171
      $region22: #{tpu_custom_call.1} parent=5 // pred_check_branch
        %174 = sbr.rel (%p172) target = $region24
      $region23: #{tpu_custom_call.1} parent=5 // pred_region
        // Predicated region
        $region25: #{tpu_custom_call.1} parent=23 // pred_check
          %p175 = pneg %p39
        $region26: #{tpu_custom_call.1} parent=23 // pred_check_branch
          %177 = sbr.rel (%p175) target = $region28
        $region27: #{tpu_custom_call.1} parent=23 // pred_region
          %s178 = sand.u32 %s29, 1
          %s179 = scalar_lea.sflag [#allocation3], %s178
          %s180 = sand.u32 %s29, 1
          %s181 = smul.addr %s180, 16
          %s182 = scalar_lea.vmem [#allocation2], %s181
          %s183 = smul.u32 2, %s19
          %185 = vsyncadd %s179, 0
          %s186 = smul.addr %s183, 8
          %s187 = scalar_lea.hbm %s0, %s186
          %s188 = sshll.u32 %s187, 4
          %s189 = int_to_ptr.hbm [resolvable:$true] %s188
          %s190 = sshll.u32 %s182, 4
          %s191 = int_to_ptr.vmem [resolvable:$true] %s190
          %196 = dma.hbm_to_vmem [thread:$0]  %s189, 256, %s191, %s179, 128, 128, 8
        $region28: #{tpu_custom_call.1} parent=23 // pred_fallthru
          _
        // Predicated region
        $region29: #{tpu_custom_call.1} parent=23 // pred_check
          %p197 = pneg %p65
        $region30: #{tpu_custom_call.1} parent=23 // pred_check_branch
          %199 = sbr.rel (%p197) target = $region32
        $region31: #{tpu_custom_call.1} parent=23 // pred_region
          %s200 = sand.u32 %s19, 1
          %s201 = scalar_lea.sflag [#allocation6], %s200
          %s202 = sand.u32 %s55, 1
          %s203 = smul.addr %s202, 16
          %s204 = scalar_lea.vmem [#allocation5], %s203
          %s205 = smul.u32 2, %s19
          %207 = vsyncadd %s201, 0
          %s208 = smul.addr %s205, 8
          %s209 = scalar_lea.hbm %s1, %s208
          %s210 = sshll.u32 %s209, 4
          %s211 = int_to_ptr.hbm [resolvable:$true] %s210
          %s212 = sshll.u32 %s204, 4
          %s213 = int_to_ptr.vmem [resolvable:$true] %s212
          %218 = dma.hbm_to_vmem [thread:$0]  %s211, 256, %s213, %s201, 128, 128, 8
        $region32: #{tpu_custom_call.1} parent=23 // pred_fallthru
          _
      $region24: #{tpu_custom_call.1} parent=5 // pred_fallthru
        _
      %p219 = scmp.le.s32.totalorder 1, %s19
      %p220 = scmp.lt.s32.totalorder %s19, 3
      %p221 = pnand %p219, %p220
      %p222 = pneg %p221
      // Predicated region
      $region33: #{tpu_custom_call.1} parent=5 // pred_check
        _
      $region34: #{tpu_custom_call.1} parent=5 // pred_check_branch
        %224 = sbr.rel (%p221) target = $region36
      $region35: #{tpu_custom_call.1} parent=5 // pred_region
        %s225 = ssub.s32 %s19, 1
        %s226 = sand.u32 %s32, 1
        %s227 = scalar_lea.sflag [#allocation3], %s226
        %s228 = sand.u32 %s32, 1
        %s229 = smul.addr %s228, 16
        %s230 = scalar_lea.vmem [#allocation2], %s229
        // Predicated region
        $region37: #{tpu_custom_call.1} parent=35 // pred_check
          %p231 = pneg %p45
        $region38: #{tpu_custom_call.1} parent=35 // pred_check_branch
          %233 = sbr.rel (%p231) target = $region40
        $region39: #{tpu_custom_call.1} parent=35 // pred_region
          %235 = dma.done %s227, 256
        $region40: #{tpu_custom_call.1} parent=35 // pred_fallthru
          _
        %s236 = sand.u32 %s24, 1
        %s237 = scalar_lea.sflag [#allocation6], %s236
        %s238 = sand.u32 %s58, 1
        %s239 = smul.addr %s238, 16
        %s240 = scalar_lea.vmem [#allocation5], %s239
        // Predicated region
        $region41: #{tpu_custom_call.1} parent=35 // pred_check
          %p241 = pneg %p71
        $region42: #{tpu_custom_call.1} parent=35 // pred_check_branch
          %243 = sbr.rel (%p241) target = $region44
        $region43: #{tpu_custom_call.1} parent=35 // pred_region
          %245 = dma.done %s237, 256
        $region44: #{tpu_custom_call.1} parent=35 // pred_fallthru
          _
        // Predicated region
        $region45: #{tpu_custom_call.1} parent=35 // pred_check
          %p246 = pneg %p92
        $region46: #{tpu_custom_call.1} parent=35 // pred_check_branch
          %248 = sbr.rel (%p246) target = $region48
        $region47: #{tpu_custom_call.1} parent=35 // pred_region
          %250 = dma.done [#allocation6], 512
        $region48: #{tpu_custom_call.1} parent=35 // pred_fallthru
          _
        %s251 = sand.u32 %s32, 1
        %s252 = scalar_lea.sflag [#allocation3], %s251
        %s253 = sand.u32 %s32, 1
        %s254 = smul.addr %s253, 16
        %s255 = scalar_lea.vmem [#allocation2], %s254
        %p256 = pneg %p45
        %p257 = pneg %p42
        %s258 = sand.u32 %s24, 1
        %s259 = scalar_lea.sflag [#allocation6], %s258
        %s260 = sand.u32 %s58, 1
        %s261 = smul.addr %s260, 16
        %s262 = scalar_lea.vmem [#allocation5], %s261
        %p263 = pneg %p71
        %p264 = pneg %p68
        %p265 = pneg %p92
        %p266 = pneg %p89
        %p267 = pneg %p113
        %p268 = pneg %p110
        %p269 = pneg %p139
        %p270 = pneg %p136
        %s271 = sand.u32 %s126, 1
        %s272 = scalar_lea.sflag [#allocation4], %s271
        %s273 = sand.u32 %s126, 1
        %s274 = smul.addr %s273, 16
        %s275 = scalar_lea.vmem [#allocation8], %s274
        %s276 = smul.u32 2, %s24
        %s277 = smul.u32 2, %s24
        %s278 = smul.u32 2, %s24
        %v279 = vld [vmem:[#allocation7] sm:$0xff]
        %v280 = vld [vmem:[#allocation7 + $0x8] sm:$0xff]
        %v281 = vld [vmem:[#allocation7 + $0x10] sm:$0xff]
        %v282 = vld [vmem:[#allocation7 + $0x18] sm:$0xff]
        %v283 = vld [vmem:[%s230] sm:$0xff]
        %v284 = vld [vmem:[%s240] sm:$0xff]
        %vm285 = vcmask 261120
        %v287 = vsel %vm285, %v283, 0
        %289 = vmatpush.msra.mxu0 0.0
        %290 = vmatpush.msra.mxu0 0.0
        %291 = vmatpush.msra.mxu0 0.0
        %292 = vmatpush.msra.mxu0 0.0
        %293 = vmatpush.msra.mxu0 0.0
        %294 = vmatpush.msra.mxu0 0.0
        %295 = vmatpush.msra.mxu0 0.0
        %296 = vmatpush.msra.mxu0 0.0
        %297 = vmatpush.msra.mxu0 0.0
        %298 = vmatpush.msra.mxu0 0.0
        %299 = vmatpush.msra.mxu0 0.0
        %300 = vmatpush.msra.mxu0 0.0
        %301 = vmatpush.msra.mxu0 %v282
        %302 = vmatpush.msra.mxu0 %v281
        %303 = vmatpush.msra.mxu0 %v280
        %304 = vmatpush.msra.mxu0 %v279
        %305 = vmatmul.f32.gmra.mxu0 %v287
        %v306 = vpop.f32.mrf.mxu0
        %v307 = vadd.f32 0.0, %v306
        %308 = vdwg.mxu0
        %vm309 = vcmask 64512
        %v310 = vsel %vm309, %v284, 0.0
        %311 = vadd.xlane.f32.xlu0 %v310
        %v312 = vpop.xlane.xlu0 %311
        %v313 = vadd.f32 %v312, 1.0
        %v315 = vsel %vm309, %v284, 0
        %317 = vmatpush.msra.mxu0 0.0
        %318 = vmatpush.msra.mxu0 0.0
        %319 = vmatpush.msra.mxu0 0.0
        %320 = vmatpush.msra.mxu0 0.0
        %321 = vmatpush.msra.mxu0 0.0
        %322 = vmatpush.msra.mxu0 0.0
        %323 = vmatpush.msra.mxu0 0.0
        %324 = vmatpush.msra.mxu0 0.0
        %325 = vmatpush.msra.mxu0 0.0
        %326 = vmatpush.msra.mxu0 0.0
        %327 = vmatpush.msra.mxu0 0.0
        %328 = vmatpush.msra.mxu0 0.0
        %329 = vmatpush.msra.mxu0 0.0
        %330 = vmatpush.msra.mxu0 0.0
        %331 = vmatpush.msra.mxu0 0.0
        %332 = vmatpush.msra.mxu0 %v307
        %333 = vmatmul.f32.gmra.mxu0 %v315
        %v334 = vpop.f32.mrf.mxu0
        %v335 = vadd.f32 0.0, %v334
        %336 = vdwg.mxu0
        %v337 = vrcp.pop %v313
        %v338 = vmul.f32 %v313, %v337
        %v339 = vsub.f32 1.0, %v338
        %v340 = vmul.f32 %v337, %v339
        %v341 = vadd.f32 %v337, %v340
        %vm342 = vweird.f32 %v313
        %vm343 = vweird.f32 %v337
        %vm344 = vmor %vm342, %vm343
        %v345 = vsel %vm344, %v337, %v341
        %v346 = vand.u32 2147483647, %v313
        %vm347 = vcmp.eq.f32.partialorder %v346, 8.507059e+37
        %v348 = vand.u32 %v313, 2147483648
        %v349 = vor.u32 1.1754944e-38, %v348
        %v350 = vsel %vm347, %v349, %v345
        %v351 = vmul.f32 %v335, %v350
        %v352 = vld [vmem:[%s3] sm:$0x1]
        %v354 = vperm.slane %v352, 0
        %v356 = vadd.f32 %v351, %v354
        %357 = vst [vmem:[%s275] sm:$0xff] %v356
        %s358 = scalar_lea.vmem %s230, 8 [#allocation2]
        %v359 = vld [vmem:[%s358] sm:$0xff]
        %s360 = scalar_lea.vmem %s240, 8 [#allocation5]
        %v361 = vld [vmem:[%s360] sm:$0xff]
        %v363 = vsel %vm285, %v359, 0
        %365 = vmatpush.msra.mxu0 0.0
        %366 = vmatpush.msra.mxu0 0.0
        %367 = vmatpush.msra.mxu0 0.0
        %368 = vmatpush.msra.mxu0 0.0
        %369 = vmatpush.msra.mxu0 0.0
        %370 = vmatpush.msra.mxu0 0.0
        %371 = vmatpush.msra.mxu0 0.0
        %372 = vmatpush.msra.mxu0 0.0
        %373 = vmatpush.msra.mxu0 0.0
        %374 = vmatpush.msra.mxu0 0.0
        %375 = vmatpush.msra.mxu0 0.0
        %376 = vmatpush.msra.mxu0 0.0
        %377 = vmatpush.msra.mxu0 %v282
        %378 = vmatpush.msra.mxu0 %v281
        %379 = vmatpush.msra.mxu0 %v280
        %380 = vmatpush.msra.mxu0 %v279
        %381 = vmatmul.f32.gmra.mxu0 %v363
        %v382 = vpop.f32.mrf.mxu0
        %v383 = vadd.f32 0.0, %v382
        %384 = vdwg.mxu0
        %v385 = vsel %vm309, %v361, 0.0
        %386 = vadd.xlane.f32.xlu0 %v385
        %v387 = vpop.xlane.xlu0 %386
        %v388 = vadd.f32 %v387, 1.0
        %v390 = vsel %vm309, %v361, 0
        %392 = vmatpush.msra.mxu0 0.0
        %393 = vmatpush.msra.mxu0 0.0
        %394 = vmatpush.msra.mxu0 0.0
        %395 = vmatpush.msra.mxu0 0.0
        %396 = vmatpush.msra.mxu0 0.0
        %397 = vmatpush.msra.mxu0 0.0
        %398 = vmatpush.msra.mxu0 0.0
        %399 = vmatpush.msra.mxu0 0.0
        %400 = vmatpush.msra.mxu0 0.0
        %401 = vmatpush.msra.mxu0 0.0
        %402 = vmatpush.msra.mxu0 0.0
        %403 = vmatpush.msra.mxu0 0.0
        %404 = vmatpush.msra.mxu0 0.0
        %405 = vmatpush.msra.mxu0 0.0
        %406 = vmatpush.msra.mxu0 0.0
        %407 = vmatpush.msra.mxu0 %v383
        %408 = vmatmul.f32.gmra.mxu0 %v390
        %v409 = vpop.f32.mrf.mxu0
        %v410 = vadd.f32 0.0, %v409
        %411 = vdwg.mxu0
        %v412 = vrcp.pop %v388
        %v413 = vmul.f32 %v388, %v412
        %v414 = vsub.f32 1.0, %v413
        %v415 = vmul.f32 %v412, %v414
        %v416 = vadd.f32 %v412, %v415
        %vm417 = vweird.f32 %v388
        %vm418 = vweird.f32 %v412
        %vm419 = vmor %vm417, %vm418
        %v420 = vsel %vm419, %v412, %v416
        %v421 = vand.u32 2147483647, %v388
        %vm422 = vcmp.eq.f32.partialorder %v421, 8.507059e+37
        %v423 = vand.u32 %v388, 2147483648
        %v424 = vor.u32 1.1754944e-38, %v423
        %v425 = vsel %vm422, %v424, %v420
        %v426 = vmul.f32 %v410, %v425
        %v427 = vld [vmem:[%s3] sm:$0x1]
        %v429 = vperm.slane %v427, 0
        %v431 = vadd.f32 %v426, %v429
        %s432 = scalar_lea.vmem %s275, 8 [#allocation8]
        %433 = vst [vmem:[%s432] sm:$0xff] %v431
        %s434 = sand.u32 %s126, 1
        %s435 = scalar_lea.sflag [#allocation4], %s434
        %s436 = sand.u32 %s126, 1
        %s437 = smul.addr %s436, 16
        %s438 = scalar_lea.vmem [#allocation8], %s437
        // Predicated region
        $region49: #{tpu_custom_call.1} parent=35 // pred_check
          %p439 = pneg %p136
        $region50: #{tpu_custom_call.1} parent=35 // pred_check_branch
          %441 = sbr.rel (%p439) target = $region52
        $region51: #{tpu_custom_call.1} parent=35 // pred_region
          %s442 = smul.u32 2, %s24
          %444 = vsyncadd %s435, 0
          %s445 = smul.addr %s442, 8
          %s446 = scalar_lea.hbm %s4, %s445
          %s447 = sshll.u32 %s438, 4
          %s448 = int_to_ptr.vmem [resolvable:$true] %s447
          %s449 = sshll.u32 %s446, 4
          %s450 = int_to_ptr.hbm [resolvable:$true] %s449
          %455 = dma.vmem_to_hbm [thread:$0]  %s448, 256, %s450, %s435, 128, 128, 8
        $region52: #{tpu_custom_call.1} parent=35 // pred_fallthru
          _
      $region36: #{tpu_custom_call.1} parent=5 // pred_fallthru
        _
      %p456 = scmp.le.s32.totalorder 2, %s19
      // Predicated region
      $region53: #{tpu_custom_call.1} parent=5 // pred_check
        %p457 = pneg %p456
      $region54: #{tpu_custom_call.1} parent=5 // pred_check_branch
        %459 = sbr.rel (%p457) target = $region56
      $region55: #{tpu_custom_call.1} parent=5 // pred_region
        %s460 = ssub.s32 %s19, 2
        // Predicated region
        $region57: #{tpu_custom_call.1} parent=55 // pred_check
          %p461 = pneg %p142
        $region58: #{tpu_custom_call.1} parent=55 // pred_check_branch
          %463 = sbr.rel (%p461) target = $region60
        $region59: #{tpu_custom_call.1} parent=55 // pred_region
          %s464 = sand.u32 %s127, 1
          %s465 = scalar_lea.sflag [#allocation4], %s464
          %s466 = sand.u32 %s127, 1
          %s467 = smul.addr %s466, 16
          %s468 = scalar_lea.vmem [#allocation8], %s467
          %470 = dma.done %s465, 256
        $region60: #{tpu_custom_call.1} parent=55 // pred_fallthru
          _
      $region56: #{tpu_custom_call.1} parent=5 // pred_fallthru
        _
    $region6: #{tpu_custom_call.1} parent=1 // loop_footer
      %s23 = sadd.s32 1, %s19
    $region7: #{tpu_custom_call.1} parent=1 // loop_footer_branch
      %18 = sbr.rel target = $region3
    $region8: #{tpu_custom_call.1} parent=1 // loop_exit
      _
    %471 = vsyncpa [#allocation3], 1
    %s472 = scalar_lea.sflag [#allocation3], 1
    %473 = vsyncpa %s472, 1
    %474 = vsyncpa [#allocation6], 1
    %s475 = scalar_lea.sflag [#allocation6], 1
    %476 = vsyncpa %s475, 1
    %477 = vsyncpa [#allocation4], 1
    %s478 = scalar_lea.sflag [#allocation4], 1
    %479 = vsyncpa %s478, 1

</llo_original>
